<compile_context>
chip_gen: v5e
topology: v5e:2x2
jax: 0.10.0
libtpu: 0.0.40
codegen_flags: <defaults>
</compile_context>

<pallas_src>
import functools

import jax
import jax.numpy as jnp
from jax.experimental import pallas as pl
from jax.experimental.pallas import tpu as pltpu

LANE = 128
SUBLANE = 8
NEG_BIG = -1.0e30  # finite "-inf" for masking padded logits


def _round_up(x, m):
    return ((x + m - 1) // m) * m


def _pad2(a, rows, cols):
    return jnp.pad(a, ((0, rows - a.shape[0]), (0, cols - a.shape[1])))


# ---------------------------------------------------------------------------
# Pallas kernels
# ---------------------------------------------------------------------------
def _actor_discrete_kernel(x_ref, w1_ref, b1_ref, w2_ref, b2_ref,
                           w3_ref, b3_ref, probs_ref, *, action_dim):
    x = x_ref[...]
    h1 = jnp.tanh(jnp.dot(x, w1_ref[...],
                          preferred_element_type=jnp.float32) + b1_ref[...])
    h2 = jnp.tanh(jnp.dot(h1, w2_ref[...],
                          preferred_element_type=jnp.float32) + b2_ref[...])
    logits = jnp.dot(h2, w3_ref[...],
                     preferred_element_type=jnp.float32) + b3_ref[...]
    # mask lanes >= action_dim so the zero-padded head does not corrupt softmax
    lane = jax.lax.broadcasted_iota(jnp.int32, logits.shape, 1)
    logits = jnp.where(lane < action_dim, logits, NEG_BIG)
    m = jnp.max(logits, axis=-1, keepdims=True)
    e = jnp.exp(logits - m)                      # padded lanes -> exp(-big) = 0
    denom = jnp.sum(e, axis=-1, keepdims=True)
    probs_ref[...] = (e * pl.reciprocal(denom, approx=True)
                      ).astype(probs_ref.dtype)


def _actor_continuous_kernel(x_ref, w1_ref, b1_ref, w2_ref, b2_ref,
                             wh_ref, bh_ref, out_ref, *, action_dim):
    x = x_ref[...]
    h1 = jnp.tanh(jnp.dot(x, w1_ref[...],
                          preferred_element_type=jnp.float32) + b1_ref[...])
    h2 = jnp.tanh(jnp.dot(h1, w2_ref[...],
                          preferred_element_type=jnp.float32) + b2_ref[...])
    # fused heads: lanes [0, A) = mean, lanes [A, 2A) = log_std, rest = padding
    y = jnp.dot(h2, wh_ref[...],
                preferred_element_type=jnp.float32) + bh_ref[...]
    lane = jax.lax.broadcasted_iota(jnp.int32, y.shape, 1)
    out = jnp.where(lane < action_dim,
                    jnp.tanh(y),                       # mean = tanh(.)
                    jnp.minimum(y, jnp.float32(1.0)))  # clamp(log_std, -inf, 1)
    out_ref[...] = out.astype(out_ref.dtype)


# ---------------------------------------------------------------------------
# Wrapper helpers
# ---------------------------------------------------------------------------
def _launch(kernel, state, weight_args, out_lanes):
    B, state_dim = state.shape
    tb = min(_round_up(B, SUBLANE), 256)          # batch block (sublane aligned)
    b_pad = _round_up(B, tb)
    x = state if b_pad == B else jnp.pad(state, ((0, b_pad - B), (0, 0)))
    grid = (b_pad // tb,)
    in_specs = [pl.BlockSpec((tb, state_dim), lambda i: (i, 0))]
    # weights/biases: whole array, constant index_map -> stay VMEM-resident
    in_specs += [pl.BlockSpec(w.shape, lambda i: (0, 0)) for w in weight_args]
    out = pl.pallas_call(
        kernel,
        out_shape=jax.ShapeDtypeStruct((b_pad, out_lanes), jnp.float32),
        grid=grid,
        in_specs=in_specs,
        out_specs=pl.BlockSpec((tb, out_lanes), lambda i: (i, 0)),
        compiler_params=pltpu.CompilerParams(
            dimension_semantics=("parallel",)),
    )(x, *weight_args)
    return out, B


def actor_forward_discrete(state, prepared):
    a = prepared["action_dim"]
    weight_args = (prepared["w1"], prepared["b1"], prepared["w2"],
                   prepared["b2"], prepared["w3"], prepared["b3"])
    kernel = functools.partial(_actor_discrete_kernel, action_dim=a)
    out, B = _launch(kernel, state, weight_args, prepared["w3"].shape[1])
    return out[:B, :a]


def actor_forward_continuous(state, prepared):
    a = prepared["action_dim"]
    weight_args = (prepared["w1"], prepared["b1"], prepared["w2"],
                   prepared["b2"], prepared["wh"], prepared["bh"])
    kernel = functools.partial(_actor_continuous_kernel, action_dim=a)
    out, B = _launch(kernel, state, weight_args, prepared["wh"].shape[1])
    mean = out[:B, :a]
    log_std = out[:B, a:2 * a]
    return mean, log_std


# ---------------------------------------------------------------------------
# Parameter init (nn.Linear-shaped, synthetic values) + one-time prep/padding
# ---------------------------------------------------------------------------
def init_params(key, state_dim, action_dim, fc1_dim, fc2_dim, is_continuous):
    ks = jax.random.split(key, 10)

    def linear(kw, kb, fan_in, fan_out):
        bound = 1.0 / jnp.sqrt(fan_in)
        w = jax.random.uniform(kw, (fan_in, fan_out), jnp.float32, -bound, bound)
        b = jax.random.uniform(kb, (1, fan_out), jnp.float32, -bound, bound)
        return w, b

    p = {}
    p["w1"], p["b1"] = linear(ks[0], ks[1], state_dim, fc1_dim)
    p["w2"], p["b2"] = linear(ks[2], ks[3], fc1_dim, fc2_dim)
    if is_continuous:
        p["wm"], p["bm"] = linear(ks[4], ks[5], fc2_dim, action_dim)
        p["ws"], p["bs"] = linear(ks[6], ks[7], fc2_dim, action_dim)
    else:
        p["w3"], p["b3"] = linear(ks[4], ks[5], fc2_dim, action_dim)
    return p


def prepare_params(p, is_continuous):
    """Zero-pad hidden/output widths to 128 lanes; fuse continuous heads.
    Done once outside the hot path."""
    state_dim, fc1 = p["w1"].shape
    fc2 = p["w2"].shape[1]
    fc1_p, fc2_p = _round_up(fc1, LANE), _round_up(fc2, LANE)
    out = {
        "w1": _pad2(p["w1"], state_dim, fc1_p), "b1": _pad2(p["b1"], 1, fc1_p),
        "w2": _pad2(p["w2"], fc1_p, fc2_p),     "b2": _pad2(p["b2"], 1, fc2_p),
    }
    if is_continuous:
        a = p["wm"].shape[1]
        head_p = _round_up(2 * a, LANE)
        wh = jnp.concatenate([p["wm"], p["ws"]], axis=1)
        bh = jnp.concatenate([p["bm"], p["bs"]], axis=1)
        out["wh"] = _pad2(wh, fc2_p, head_p)
        out["bh"] = _pad2(bh, 1, head_p)
        out["action_dim"] = a
    else:
        a = p["w3"].shape[1]
        act_p = _round_up(a, LANE)
        out["w3"] = _pad2(p["w3"], fc2_p, act_p)
        out["b3"] = _pad2(p["b3"], 1, act_p)
        out["action_dim"] = a
    return out


# ---------------------------------------------------------------------------
# Pure-JAX references (unpadded params)
# ---------------------------------------------------------------------------
def ref_discrete(state, p):
    h = jnp.tanh(state @ p["w1"] + p["b1"])
    h = jnp.tanh(h @ p["w2"] + p["b2"])
    return jax.nn.softmax(h @ p["w3"] + p["b3"], axis=-1)


def ref_continuous(state, p):
    h = jnp.tanh(state @ p["w1"] + p["b1"])
    h = jnp.tanh(h @ p["w2"] + p["b2"])
    mean = jnp.tanh(h @ p["wm"] + p["bm"])
    log_std = jnp.minimum(h @ p["ws"] + p["bs"], 1.0)
    return mean, log_std


if __name__ == "__main__":
    key = jax.random.PRNGKey(0)
    k_state, k_p1, k_p2 = jax.random.split(key, 3)

    B, state_dim, action_dim, fc1_dim, fc2_dim = 2, 8, 4, 32, 32
    state = jax.random.normal(k_state, (B, state_dim), jnp.float32)

    # discrete head
    p_disc = init_params(k_p1, state_dim, action_dim, fc1_dim, fc2_dim,
                         is_continuous=False)
    prep_disc = prepare_params(p_disc, is_continuous=False)
    probs = actor_forward_discrete(state, prep_disc)
    jax.block_until_ready(probs)
    # approx (EUP) reciprocal in the softmax -> slightly looser tolerance
    assert probs.shape == (B, action_dim)
    assert jnp.allclose(probs, ref_discrete(state, p_disc), atol=2e-3)
    assert jnp.allclose(jnp.sum(probs, axis=-1), 1.0, atol=2e-3)

    # continuous head
    p_cont = init_params(k_p2, state_dim, action_dim, fc1_dim, fc2_dim,
                         is_continuous=True)
    prep_cont = prepare_params(p_cont, is_continuous=True)
    mean, log_std = actor_forward_continuous(state, prep_cont)
    jax.block_until_ready((mean, log_std))
    rm, rs = ref_continuous(state, p_cont)
    assert mean.shape == (B, action_dim) and log_std.shape == (B, action_dim)
    assert jnp.allclose(mean, rm, atol=1e-5)
    assert jnp.allclose(log_std, rs, atol=1e-5)

    print("KERNEL_OK")
</pallas_src>

<mosaic_0001>
module attributes {stable_mosaic.version = 11 : i64} {
  func.func @_actor_discrete_kernel(%arg0: i32, %arg1: memref<8x8xf32, #tpu.memory_space<vmem>>, %arg2: memref<8x128xf32, #tpu.memory_space<vmem>>, %arg3: memref<1x128xf32, #tpu.memory_space<vmem>>, %arg4: memref<128x128xf32, #tpu.memory_space<vmem>>, %arg5: memref<1x128xf32, #tpu.memory_space<vmem>>, %arg6: memref<128x128xf32, #tpu.memory_space<vmem>>, %arg7: memref<1x128xf32, #tpu.memory_space<vmem>>, %arg8: memref<8x128xf32, #tpu.memory_space<vmem>>) attributes {dimension_semantics = [#tpu.dimension_semantics<parallel>], iteration_bounds = array<i64: 1>, scalar_prefetch = 0 : i64, scratch_operands = 0 : i64, tpu.core_type = #tpu.core_type<tc>, window_params = [{transform_indices = @transform_0, window_bounds = array<i64: 8, 8>}, {pipeline_mode = #tpu.pipeline_mode<synchronous>, transform_indices = @transform_1, window_bounds = array<i64: 8, 128>}, {pipeline_mode = #tpu.pipeline_mode<synchronous>, transform_indices = @transform_2, window_bounds = array<i64: 1, 128>}, {pipeline_mode = #tpu.pipeline_mode<synchronous>, transform_indices = @transform_3, window_bounds = array<i64: 128, 128>}, {pipeline_mode = #tpu.pipeline_mode<synchronous>, transform_indices = @transform_4, window_bounds = array<i64: 1, 128>}, {pipeline_mode = #tpu.pipeline_mode<synchronous>, transform_indices = @transform_5, window_bounds = array<i64: 128, 128>}, {pipeline_mode = #tpu.pipeline_mode<synchronous>, transform_indices = @transform_6, window_bounds = array<i64: 1, 128>}, {transform_indices = @transform_7, window_bounds = array<i64: 8, 128>}]} {
    %c0 = arith.constant 0 : index
    %c0_0 = arith.constant 0 : index
    %0 = vector.load %arg1[%c0, %c0_0] : memref<8x8xf32, #tpu.memory_space<vmem>>, vector<8x8xf32>
    %c0_1 = arith.constant 0 : index
    %c0_2 = arith.constant 0 : index
    %1 = vector.load %arg2[%c0_1, %c0_2] : memref<8x128xf32, #tpu.memory_space<vmem>>, vector<8x128xf32>
    %cst = arith.constant dense<0.000000e+00> : vector<8x128xf32>
    %2 = tpu.matmul %0, %1, %cst {dimension_numbers = #tpu.dot_dimension_numbers<[1], [0], [0], [1], [0, 0, 1, 1], [], []>} : vector<8x8xf32>, vector<8x128xf32>, vector<8x128xf32> -> vector<8x128xf32>
    %c0_3 = arith.constant 0 : index
    %c0_4 = arith.constant 0 : index
    %3 = vector.load %arg3[%c0_3, %c0_4] : memref<1x128xf32, #tpu.memory_space<vmem>>, vector<1x128xf32>
    %4 = vector.broadcast %3 : vector<1x128xf32> to vector<8x128xf32>
    %5 = arith.addf %2, %4 : vector<8x128xf32>
    %6 = math.tanh %5 : vector<8x128xf32>
    %c0_5 = arith.constant 0 : index
    %c0_6 = arith.constant 0 : index
    %7 = vector.load %arg4[%c0_5, %c0_6] : memref<128x128xf32, #tpu.memory_space<vmem>>, vector<128x128xf32>
    %cst_7 = arith.constant dense<0.000000e+00> : vector<8x128xf32>
    %8 = tpu.matmul %6, %7, %cst_7 {dimension_numbers = #tpu.dot_dimension_numbers<[1], [0], [0], [1], [0, 0, 1, 1], [], []>} : vector<8x128xf32>, vector<128x128xf32>, vector<8x128xf32> -> vector<8x128xf32>
    %c0_8 = arith.constant 0 : index
    %c0_9 = arith.constant 0 : index
    %9 = vector.load %arg5[%c0_8, %c0_9] : memref<1x128xf32, #tpu.memory_space<vmem>>, vector<1x128xf32>
    %10 = vector.broadcast %9 : vector<1x128xf32> to vector<8x128xf32>
    %11 = arith.addf %8, %10 : vector<8x128xf32>
    %12 = math.tanh %11 : vector<8x128xf32>
    %c0_10 = arith.constant 0 : index
    %c0_11 = arith.constant 0 : index
    %13 = vector.load %arg6[%c0_10, %c0_11] : memref<128x128xf32, #tpu.memory_space<vmem>>, vector<128x128xf32>
    %cst_12 = arith.constant dense<0.000000e+00> : vector<8x128xf32>
    %14 = tpu.matmul %12, %13, %cst_12 {dimension_numbers = #tpu.dot_dimension_numbers<[1], [0], [0], [1], [0, 0, 1, 1], [], []>} : vector<8x128xf32>, vector<128x128xf32>, vector<8x128xf32> -> vector<8x128xf32>
    %c0_13 = arith.constant 0 : index
    %c0_14 = arith.constant 0 : index
    %15 = vector.load %arg7[%c0_13, %c0_14] : memref<1x128xf32, #tpu.memory_space<vmem>>, vector<1x128xf32>
    %16 = vector.broadcast %15 : vector<1x128xf32> to vector<8x128xf32>
    %17 = arith.addf %14, %16 : vector<8x128xf32>
    %18 = tpu.iota {dimensions = array<i32: 1>} : vector<8x128xi32>
    %c4_i32 = arith.constant 4 : i32
    %19 = vector.broadcast %c4_i32 : i32 to vector<8x128xi32>
    %20 = arith.cmpi slt, %18, %19 : vector<8x128xi32>
    %cst_15 = arith.constant -1.000000e+30 : f32
    %21 = vector.broadcast %cst_15 : f32 to vector<8x128xf32>
    %22 = arith.select %20, %17, %21 : vector<8x128xi1>, vector<8x128xf32>
    %cst_16 = arith.constant dense<0xFF800000> : vector<8xf32>
    %23 = vector.multi_reduction <maximumf>, %22, %cst_16 [1] : vector<8x128xf32> to vector<8xf32>
    %24 = vector.shape_cast %23 : vector<8xf32> to vector<8x1xf32>
    %25 = vector.broadcast %24 : vector<8x1xf32> to vector<8x128xf32>
    %26 = arith.subf %22, %25 : vector<8x128xf32>
    %27 = math.exp %26 : vector<8x128xf32>
    %cst_17 = arith.constant dense<0.000000e+00> : vector<8xf32>
    %28 = vector.multi_reduction <add>, %27, %cst_17 [1] : vector<8x128xf32> to vector<8xf32>
    %29 = vector.shape_cast %28 : vector<8xf32> to vector<8x1xf32>
    %30 = tpu.reciprocal %29 {approx = true} : vector<8x1xf32> -> vector<8x1xf32>
    %31 = vector.broadcast %30 : vector<8x1xf32> to vector<8x128xf32>
    %32 = arith.mulf %27, %31 : vector<8x128xf32>
    %c0_18 = arith.constant 0 : index
    %c0_19 = arith.constant 0 : index
    %33 = vector.load %arg8[%c0_18, %c0_19] : memref<8x128xf32, #tpu.memory_space<vmem>>, vector<8x128xf32>
    tpu.vector_store %arg8[%c0_18, %c0_19], %32 {strides = array<i32>} : memref<8x128xf32, #tpu.memory_space<vmem>>, vector<8x128xf32>,
    return
  }
  func.func @transform_0(%arg0: i32) -> (i32, i32) {
    %c0_i32 = arith.constant 0 : i32
    %c0_i32_0 = arith.constant 0 : i32
    return %arg0, %c0_i32 : i32, i32
  }
  func.func @transform_1(%arg0: i32) -> (i32, i32) {
    %c0_i32 = arith.constant 0 : i32
    %c0_i32_0 = arith.constant 0 : i32
    %c0_i32_1 = arith.constant 0 : i32
    return %c0_i32, %c0_i32_0 : i32, i32
  }
  func.func @transform_2(%arg0: i32) -> (i32, i32) {
    %c0_i32 = arith.constant 0 : i32
    %c0_i32_0 = arith.constant 0 : i32
    %c0_i32_1 = arith.constant 0 : i32
    return %c0_i32, %c0_i32_0 : i32, i32
  }
  func.func @transform_3(%arg0: i32) -> (i32, i32) {
    %c0_i32 = arith.constant 0 : i32
    %c0_i32_0 = arith.constant 0 : i32
    %c0_i32_1 = arith.constant 0 : i32
    return %c0_i32, %c0_i32_0 : i32, i32
  }
  func.func @transform_4(%arg0: i32) -> (i32, i32) {
    %c0_i32 = arith.constant 0 : i32
    %c0_i32_0 = arith.constant 0 : i32
    %c0_i32_1 = arith.constant 0 : i32
    return %c0_i32, %c0_i32_0 : i32, i32
  }
  func.func @transform_5(%arg0: i32) -> (i32, i32) {
    %c0_i32 = arith.constant 0 : i32
    %c0_i32_0 = arith.constant 0 : i32
    %c0_i32_1 = arith.constant 0 : i32
    return %c0_i32, %c0_i32_0 : i32, i32
  }
  func.func @transform_6(%arg0: i32) -> (i32, i32) {
    %c0_i32 = arith.constant 0 : i32
    %c0_i32_0 = arith.constant 0 : i32
    %c0_i32_1 = arith.constant 0 : i32
    return %c0_i32, %c0_i32_0 : i32, i32
  }
  func.func @transform_7(%arg0: i32) -> (i32, i32) {
    %c0_i32 = arith.constant 0 : i32
    %c0_i32_0 = arith.constant 0 : i32
    return %arg0, %c0_i32 : i32, i32
  }
}

</mosaic_0001>

<llo_original>
// kernel: tpu_custom_call.1
$region0: #{tpu_custom_call.1}
  #allocation0 [shape = 'u32[]', space=smem, size = 0x4, offset = 0x4, fixed_abs, tag = 'smem constant byte address 0x4 - core index']
  #allocation1 [shape = 'u32[72,128]{1,0:T(1,128)}', space=vmem, size = 0x9000, scoped, tag = 'internal scratch']
  %s0 = inlined_call_operand.hbm [shape: f32[8,8], index: 0, kind: input, shape index: {}]
  %s1 = inlined_call_operand.hbm [shape: f32[8,128], index: 1, kind: input, shape index: {}]
  %s2 = inlined_call_operand.vmem [shape: f32[1,128], index: 2, kind: input, shape index: {}]
  %s3 = inlined_call_operand.hbm [shape: f32[128,128], index: 3, kind: input, shape index: {}]
  %s4 = inlined_call_operand.vmem [shape: f32[1,128], index: 4, kind: input, shape index: {}]
  %s5 = inlined_call_operand.hbm [shape: f32[128,128], index: 5, kind: input, shape index: {}]
  %s6 = inlined_call_operand.vmem [shape: f32[1,128], index: 6, kind: input, shape index: {}]
  %s7 = inlined_call_operand.hbm [shape: f32[8,128], index: 7, kind: output, shape index: {}]
  %s8 = sld [smem:[#allocation0]]
  $region54: #{tpu_custom_call.1} parent=0
    _
  %s10 = ssub.s32 1, %s8
  %s11 = scalar_select 0, %s10, %s8
  $region1: #{tpu_custom_call.1} parent=0
    #allocation2 [shape = 'u8[4096]{0}', space=vmem, size = 0x1000, scoped, tag = 'input window, operand 0, single buffered']
    #allocation3 [shape = 's32[1]{0}', space=sflag, size = 0x4, scoped, tag = 'scoped memory for tpu_custom_call.1']
    #allocation4 [shape = 's32[1]{0}', space=sflag, size = 0x4, scoped, tag = 'scoped memory for tpu_custom_call.1']
    #allocation5 [shape = 'u8[4096]{0}', space=vmem, size = 0x1000, scoped, tag = 'input window, operand 1, single buffered']
    #allocation6 [shape = 's32[1]{0}', space=sflag, size = 0x4, scoped, tag = 'scoped memory for tpu_custom_call.1']
    #allocation7 [shape = 'u8[65536]{0}', space=vmem, size = 0x10000, scoped, tag = 'input window, operand 3, single buffered']
    #allocation8 [shape = 'u8[65536]{0}', space=vmem, size = 0x10000, scoped, tag = 'input window, operand 5, single buffered']
    #allocation9 [shape = 's32[1]{0}', space=sflag, size = 0x4, scoped, tag = 'scoped memory for tpu_custom_call.1']
    #allocation10 [shape = 'u8[4096]{0}', space=vmem, size = 0x1000, scoped, tag = 'output window, operand 0, single buffered']
    %12 = vsyncpa [#allocation3], 0
    %13 = vsyncpa [#allocation6], 0
    %14 = vsyncpa [#allocation9], 0
    %15 = vsyncpa [#allocation4], 0
    // Predicated region
    $region2: #{tpu_custom_call.1} parent=1 // pred_check
      _
    $region3: #{tpu_custom_call.1} parent=1 // pred_check_branch
      %17 = sbr.rel (0) target = $region5
    $region4: #{tpu_custom_call.1} parent=1 // pred_region
      %19 = vsyncadd [#allocation3], 0
      %s21 = sshll.u32 %s0, 4
      %s22 = int_to_ptr.hbm [resolvable:$true] %s21
      %s23 = sshll.u32 [#allocation2], 4
      %s24 = int_to_ptr.vmem [resolvable:$true] %s23
      %26 = dma.hbm_to_vmem [thread:$0]  %s22, 128, %s24, [#allocation3]
    $region5: #{tpu_custom_call.1} parent=1 // pred_fallthru
      _
    // Predicated region
    $region6: #{tpu_custom_call.1} parent=1 // pred_check
      _
    $region7: #{tpu_custom_call.1} parent=1 // pred_check_branch
      %28 = sbr.rel (0) target = $region9
    $region8: #{tpu_custom_call.1} parent=1 // pred_region
      %30 = vsyncadd [#allocation6], 0
      %s32 = sshll.u32 %s1, 4
      %s33 = int_to_ptr.hbm [resolvable:$true] %s32
      %s34 = sshll.u32 [#allocation5], 4
      %s35 = int_to_ptr.vmem [resolvable:$true] %s34
      %37 = dma.hbm_to_vmem [thread:$0]  %s33, 128, %s35, [#allocation6]
    $region9: #{tpu_custom_call.1} parent=1 // pred_fallthru
      _
    // Predicated region
    $region10: #{tpu_custom_call.1} parent=1 // pred_check
      _
    $region11: #{tpu_custom_call.1} parent=1 // pred_check_branch
      %39 = sbr.rel (0) target = $region13
    $region12: #{tpu_custom_call.1} parent=1 // pred_region
      _
    $region13: #{tpu_custom_call.1} parent=1 // pred_fallthru
      _
    // Predicated region
    $region14: #{tpu_custom_call.1} parent=1 // pred_check
      _
    $region15: #{tpu_custom_call.1} parent=1 // pred_check_branch
      %41 = sbr.rel (0) target = $region17
    $region16: #{tpu_custom_call.1} parent=1 // pred_region
      %43 = vsyncadd [#allocation6], 0
      %s44 = sshll.u32 %s3, 4
      %s45 = int_to_ptr.hbm [resolvable:$true] %s44
      %s46 = sshll.u32 [#allocation7], 4
      %s47 = int_to_ptr.vmem [resolvable:$true] %s46
      %52 = dma.hbm_to_vmem [thread:$0]  %s45, 2048, %s47, [#allocation6], 128, 128, 8
    $region17: #{tpu_custom_call.1} parent=1 // pred_fallthru
      _
    // Predicated region
    $region18: #{tpu_custom_call.1} parent=1 // pred_check
      _
    $region19: #{tpu_custom_call.1} parent=1 // pred_check_branch
      %54 = sbr.rel (0) target = $region21
    $region20: #{tpu_custom_call.1} parent=1 // pred_region
      _
    $region21: #{tpu_custom_call.1} parent=1 // pred_fallthru
      _
    // Predicated region
    $region22: #{tpu_custom_call.1} parent=1 // pred_check
      _
    $region23: #{tpu_custom_call.1} parent=1 // pred_check_branch
      %56 = sbr.rel (0) target = $region25
    $region24: #{tpu_custom_call.1} parent=1 // pred_region
      %58 = vsyncadd [#allocation9], 0
      %s59 = sshll.u32 %s5, 4
      %s60 = int_to_ptr.hbm [resolvable:$true] %s59
      %s61 = sshll.u32 [#allocation8], 4
      %s62 = int_to_ptr.vmem [resolvable:$true] %s61
      %67 = dma.hbm_to_vmem [thread:$0]  %s60, 2048, %s62, [#allocation9], 128, 128, 8
    $region25: #{tpu_custom_call.1} parent=1 // pred_fallthru
      _
    // Predicated region
    $region26: #{tpu_custom_call.1} parent=1 // pred_check
      _
    $region27: #{tpu_custom_call.1} parent=1 // pred_check_branch
      %69 = sbr.rel (0) target = $region29
    $region28: #{tpu_custom_call.1} parent=1 // pred_region
      _
    $region29: #{tpu_custom_call.1} parent=1 // pred_fallthru
      _
    // Predicated region
    $region30: #{tpu_custom_call.1} parent=1 // pred_check
      _
    $region31: #{tpu_custom_call.1} parent=1 // pred_check_branch
      %71 = sbr.rel (0) target = $region33
    $region32: #{tpu_custom_call.1} parent=1 // pred_region
      %73 = dma.done [#allocation3], 128
    $region33: #{tpu_custom_call.1} parent=1 // pred_fallthru
      _
    // Predicated region
    $region34: #{tpu_custom_call.1} parent=1 // pred_check
      _
    $region35: #{tpu_custom_call.1} parent=1 // pred_check_branch
      %75 = sbr.rel (0) target = $region37
    $region36: #{tpu_custom_call.1} parent=1 // pred_region
      %77 = dma.done [#allocation6], 128
    $region37: #{tpu_custom_call.1} parent=1 // pred_fallthru
      _
    // Predicated region
    $region38: #{tpu_custom_call.1} parent=1 // pred_check
      _
    $region39: #{tpu_custom_call.1} parent=1 // pred_check_branch
      %79 = sbr.rel (0) target = $region41
    $region40: #{tpu_custom_call.1} parent=1 // pred_region
      %81 = dma.done [#allocation6], 2048
    $region41: #{tpu_custom_call.1} parent=1 // pred_fallthru
      _
    // Predicated region
    $region42: #{tpu_custom_call.1} parent=1 // pred_check
      _
    $region43: #{tpu_custom_call.1} parent=1 // pred_check_branch
      %83 = sbr.rel (0) target = $region45
    $region44: #{tpu_custom_call.1} parent=1 // pred_region
      %85 = dma.done [#allocation9], 2048
    $region45: #{tpu_custom_call.1} parent=1 // pred_fallthru
      _
    %v86 = vld [vmem:[#allocation2] sm:$0xff]
    %v87 = vld [vmem:[#allocation5] sm:$0xff]
    %v88 = vld [vmem:[%s2] sm:$0x1]
    %v90 = vperm.slane %v88, 0
    %vm92 = vcmask 64512
    %v94 = vsel %vm92, %v86, 0
    %96 = vmatpush.msra.mxu0 0.0
    %97 = vmatpush.msra.mxu0 0.0
    %98 = vmatpush.msra.mxu0 0.0
    %99 = vmatpush.msra.mxu0 0.0
    %100 = vmatpush.msra.mxu0 0.0
    %101 = vmatpush.msra.mxu0 0.0
    %102 = vmatpush.msra.mxu0 0.0
    %103 = vmatpush.msra.mxu0 0.0
    %104 = vmatpush.msra.mxu0 0.0
    %105 = vmatpush.msra.mxu0 0.0
    %106 = vmatpush.msra.mxu0 0.0
    %107 = vmatpush.msra.mxu0 0.0
    %108 = vmatpush.msra.mxu0 0.0
    %109 = vmatpush.msra.mxu0 0.0
    %110 = vmatpush.msra.mxu0 0.0
    %111 = vmatpush.msra.mxu0 %v87
    %112 = vmatmul.f32.gmra.mxu0 %v94
    %v113 = vpop.f32.mrf.mxu0
    %v114 = vadd.f32 %v90, %v113
    %115 = vdwg.mxu0
    %v116 = vtanh.pop %v114
    %v117 = vld [vmem:[#allocation7] sm:$0xff]
    %v118 = vld [vmem:[#allocation7 + $0x8] sm:$0xff]
    %v119 = vld [vmem:[#allocation7 + $0x10] sm:$0xff]
    %v120 = vld [vmem:[#allocation7 + $0x18] sm:$0xff]
    %v121 = vld [vmem:[#allocation7 + $0x20] sm:$0xff]
    %v122 = vld [vmem:[#allocation7 + $0x28] sm:$0xff]
    %v123 = vld [vmem:[#allocation7 + $0x30] sm:$0xff]
    %v124 = vld [vmem:[#allocation7 + $0x38] sm:$0xff]
    %v125 = vld [vmem:[#allocation7 + $0x40] sm:$0xff]
    %v126 = vld [vmem:[#allocation7 + $0x48] sm:$0xff]
    %v127 = vld [vmem:[#allocation7 + $0x50] sm:$0xff]
    %v128 = vld [vmem:[#allocation7 + $0x58] sm:$0xff]
    %v129 = vld [vmem:[#allocation7 + $0x60] sm:$0xff]
    %v130 = vld [vmem:[#allocation7 + $0x68] sm:$0xff]
    %v131 = vld [vmem:[#allocation7 + $0x70] sm:$0xff]
    %v132 = vld [vmem:[#allocation7 + $0x78] sm:$0xff]
    %v133 = vld [vmem:[%s4] sm:$0x1]
    %v135 = vperm.slane %v133, 0
    %137 = vmatpush.msra.mxu0 %v132
    %138 = vmatpush.msra.mxu0 %v131
    %139 = vmatpush.msra.mxu0 %v130
    %140 = vmatpush.msra.mxu0 %v129
    %141 = vmatpush.msra.mxu0 %v128
    %142 = vmatpush.msra.mxu0 %v127
    %143 = vmatpush.msra.mxu0 %v126
    %144 = vmatpush.msra.mxu0 %v125
    %145 = vmatpush.msra.mxu0 %v124
    %146 = vmatpush.msra.mxu0 %v123
    %147 = vmatpush.msra.mxu0 %v122
    %148 = vmatpush.msra.mxu0 %v121
    %149 = vmatpush.msra.mxu0 %v120
    %150 = vmatpush.msra.mxu0 %v119
    %151 = vmatpush.msra.mxu0 %v118
    %152 = vmatpush.msra.mxu0 %v117
    %153 = vmatmul.f32.gmra.mxu0 %v116
    %v154 = vpop.f32.mrf.mxu0
    %v155 = vadd.f32 %v135, %v154
    %156 = vdwg.mxu0
    %v157 = vtanh.pop %v155
    %v158 = vld [vmem:[#allocation8] sm:$0xff]
    %v159 = vld [vmem:[#allocation8 + $0x8] sm:$0xff]
    %v160 = vld [vmem:[#allocation8 + $0x10] sm:$0xff]
    %v161 = vld [vmem:[#allocation8 + $0x18] sm:$0xff]
    %v162 = vld [vmem:[#allocation8 + $0x20] sm:$0xff]
    %v163 = vld [vmem:[#allocation8 + $0x28] sm:$0xff]
    %v164 = vld [vmem:[#allocation8 + $0x30] sm:$0xff]
    %v165 = vld [vmem:[#allocation8 + $0x38] sm:$0xff]
    %v166 = vld [vmem:[#allocation8 + $0x40] sm:$0xff]
    %v167 = vld [vmem:[#allocation8 + $0x48] sm:$0xff]
    %v168 = vld [vmem:[#allocation8 + $0x50] sm:$0xff]
    %v169 = vld [vmem:[#allocation8 + $0x58] sm:$0xff]
    %v170 = vld [vmem:[#allocation8 + $0x60] sm:$0xff]
    %v171 = vld [vmem:[#allocation8 + $0x68] sm:$0xff]
    %v172 = vld [vmem:[#allocation8 + $0x70] sm:$0xff]
    %v173 = vld [vmem:[#allocation8 + $0x78] sm:$0xff]
    %v174 = vld [vmem:[%s6] sm:$0x1]
    %v176 = vperm.slane %v174, 0
    %178 = vmatpush.msra.mxu0 %v173
    %179 = vmatpush.msra.mxu0 %v172
    %180 = vmatpush.msra.mxu0 %v171
    %181 = vmatpush.msra.mxu0 %v170
    %182 = vmatpush.msra.mxu0 %v169
    %183 = vmatpush.msra.mxu0 %v168
    %184 = vmatpush.msra.mxu0 %v167
    %185 = vmatpush.msra.mxu0 %v166
    %186 = vmatpush.msra.mxu0 %v165
    %187 = vmatpush.msra.mxu0 %v164
    %188 = vmatpush.msra.mxu0 %v163
    %189 = vmatpush.msra.mxu0 %v162
    %190 = vmatpush.msra.mxu0 %v161
    %191 = vmatpush.msra.mxu0 %v160
    %192 = vmatpush.msra.mxu0 %v159
    %193 = vmatpush.msra.mxu0 %v158
    %194 = vmatmul.f32.gmra.mxu0 %v157
    %v195 = vpop.f32.mrf.mxu0
    %v196 = vadd.f32 %v176, %v195
    %197 = vdwg.mxu0
    %v198 = vlaneseq
    %v199 = vand.u32 %v198, 127
    %vm200 = vcmp.lt.s32.totalorder %v199, 4
    %v201 = vsel %vm200, %v196, -1e+30
    %202 = vmax.xlane.f32.xlu0 %v201
    %v203 = vpop.xlane.xlu0 %202
    %v204 = vsub.f32 %v201, %v203
    %v205 = vmul.f32 %v204, 1.442695
    %v206 = vpow.pop %v205
    %207 = vadd.xlane.f32.xlu0 %v206
    %v208 = vpop.xlane.xlu0 %207
    %v209 = vrcp.pop %v208
    %v210 = vmul.f32 %v206, %v209
    %211 = vst [vmem:[#allocation10] sm:$0xff] %v210
    // Predicated region
    $region46: #{tpu_custom_call.1} parent=1 // pred_check
      _
    $region47: #{tpu_custom_call.1} parent=1 // pred_check_branch
      %213 = sbr.rel (0) target = $region49
    $region48: #{tpu_custom_call.1} parent=1 // pred_region
      %215 = vsyncadd [#allocation4], 0
      %s217 = sshll.u32 [#allocation10], 4
      %s218 = int_to_ptr.vmem [resolvable:$true] %s217
      %s219 = sshll.u32 %s7, 4
      %s220 = int_to_ptr.hbm [resolvable:$true] %s219
      %222 = dma.vmem_to_hbm [thread:$0]  %s218, 128, %s220, [#allocation4]
    $region49: #{tpu_custom_call.1} parent=1 // pred_fallthru
      _
    // Predicated region
    $region50: #{tpu_custom_call.1} parent=1 // pred_check
      _
    $region51: #{tpu_custom_call.1} parent=1 // pred_check_branch
      %224 = sbr.rel (0) target = $region53
    $region52: #{tpu_custom_call.1} parent=1 // pred_region
      %226 = dma.done [#allocation4], 128
    $region53: #{tpu_custom_call.1} parent=1 // pred_fallthru
      _
    %227 = vsyncpa [#allocation3], 1
    %228 = vsyncpa [#allocation6], 1
    %229 = vsyncpa [#allocation9], 1
    %230 = vsyncpa [#allocation4], 1

</llo_original>
